<compile_context>
chip_gen: v5e
topology: v5e:2x2
jax: 0.10.0
libtpu: 0.0.40
codegen_flags: <defaults>
</compile_context>

<pallas_src>
import math
import functools
import itertools

import jax
import jax.numpy as jnp
from jax.experimental import pallas as pl
from jax.experimental.pallas import tpu as pltpu


def _rup(x, m):
    return (x + m - 1) // m * m


def _pick_tk(Kp):
    return next(c for c in (1024, 512, 384, 256, 128) if Kp % c == 0)


# ---------------------------------------------------------------------------
# Weight quantization: int8 codes + per-output-channel f32 scale.
# The kernels multiply the f32 accumulator by the scale, so the MXU always
# runs bf16 x bf16 (works unchanged on v5e / v6e / v7x).
# ---------------------------------------------------------------------------
def quantize_w(w_f32):
    amax = jnp.max(jnp.abs(w_f32), axis=0, keepdims=True)          # (1, N)
    scale = jnp.maximum(amax, 1e-12) / 127.0
    codes = jnp.clip(jnp.round(w_f32 / scale), -127, 127).astype(jnp.int8)
    return codes, scale.astype(jnp.float32)


# ---------------------------------------------------------------------------
# Pallas kernel 1: tiled matmul (bf16 A x int8 W codes), f32 accumulate,
#                  per-channel dequant scale + optional bias + optional ReLU
# ---------------------------------------------------------------------------
def _mm_kernel(a_ref, w_ref, ws_ref, *rest, relu, has_bias):
    if has_bias:
        b_ref, o_ref, acc_ref = rest
    else:
        o_ref, acc_ref = rest
    k = pl.program_id(2)

    @pl.when(k == 0)
    def _():
        acc_ref[...] = jnp.zeros_like(acc_ref)

    w = w_ref[...].astype(jnp.float32).astype(jnp.bfloat16)        # int8 codes -> bf16
    acc_ref[...] += jnp.dot(a_ref[...], w, preferred_element_type=jnp.float32)

    @pl.when(k == pl.num_programs(2) - 1)
    def _():
        out = acc_ref[...] * ws_ref[...]                            # dequant per channel
        if has_bias:
            out = out + b_ref[...]
        if relu:
            out = jnp.maximum(out, 0.0)
        o_ref[...] = out.astype(o_ref.dtype)


@functools.partial(jax.jit, static_argnames=("relu", "out_dtype"))
def matmul_q(a, w_q, w_s, bias=None, relu=False, out_dtype=jnp.bfloat16):
    """a:(M,K) @ dequant(w_q,w_s):(K,N) [+ bias] [+ ReLU]."""
    M, K = a.shape
    _, N = w_q.shape
    a = a.astype(jnp.bfloat16)

    Mp = _rup(M, 8)
    if Mp > 128:
        Mp = _rup(Mp, 128)
    Kp = _rup(K, 128)
    Np = _rup(N, 128)
    tm = 256 if Mp % 256 == 0 else min(Mp, 128)
    tk = _pick_tk(Kp)
    tn = 256 if Np % 256 == 0 else 128

    a_p = jnp.pad(a, ((0, Mp - M), (0, Kp - K)))
    w_p = jnp.pad(w_q, ((0, Kp - K), (0, Np - N)))
    ws_p = jnp.pad(w_s, ((0, 0), (0, Np - N)))

    has_bias = bias is not None
    inputs = [a_p, w_p, ws_p]
    in_specs = [
        pl.BlockSpec((tm, tk), lambda i, j, k: (i, k)),
        pl.BlockSpec((tk, tn), lambda i, j, k: (k, j)),
        pl.BlockSpec((1, tn), lambda i, j, k: (0, j)),
    ]
    if has_bias:
        b_p = jnp.pad(bias.reshape(1, -1).astype(jnp.float32),
                      ((0, 0), (0, Np - N)))
        inputs.append(b_p)
        in_specs.append(pl.BlockSpec((1, tn), lambda i, j, k: (0, j)))

    # TODO(synk): pl.Buffered(3) on the W spec would hide more DMA latency on
    # the tiny-M layers; left at default depth 2 for portability.
    out = pl.pallas_call(
        functools.partial(_mm_kernel, relu=relu, has_bias=has_bias),
        out_shape=jax.ShapeDtypeStruct((Mp, Np), out_dtype),
        grid_spec=pltpu.PrefetchScalarGridSpec(
            num_scalar_prefetch=0,
            grid=(Mp // tm, Np // tn, Kp // tk),
            in_specs=in_specs,
            out_specs=pl.BlockSpec((tm, tn), lambda i, j, k: (i, j)),
            scratch_shapes=[pltpu.VMEM((tm, tn), jnp.float32)],
        ),
        compiler_params=pltpu.CompilerParams(
            dimension_semantics=("parallel", "parallel", "arbitrary")),
    )(*inputs)
    return out[:M, :N]


# ---------------------------------------------------------------------------
# Pallas kernel 2: matmul with BatchNorm (+residual +ReLU) fused in the
#                  final-k epilogue.  Requires the whole (padded) M dimension
#                  in one tile so batch statistics can be computed in-kernel.
# ---------------------------------------------------------------------------
def _mm_bn_kernel(a_ref, w_ref, ws_ref, g_ref, b_ref, *rest,
                  relu, has_res, m_rows):
    if has_res:
        r_ref, o_ref, acc_ref = rest
    else:
        o_ref, acc_ref = rest
    k = pl.program_id(1)

    @pl.when(k == 0)
    def _():
        acc_ref[...] = jnp.zeros_like(acc_ref)

    w = w_ref[...].astype(jnp.float32).astype(jnp.bfloat16)        # int8 codes -> bf16
    acc_ref[...] += jnp.dot(a_ref[...], w, preferred_element_type=jnp.float32)

    @pl.when(k == pl.num_programs(1) - 1)
    def _():
        x = acc_ref[...] * ws_ref[...]                              # (Mp, tn) f32
        inv_n = 1.0 / m_rows
        # padded rows of the accumulator are exactly zero, so sums are exact
        mean = jnp.sum(x, axis=0, keepdims=True) * inv_n
        row = jax.lax.broadcasted_iota(jnp.int32, x.shape, 0)
        xc = jnp.where(row < m_rows, x - mean, 0.0)
        var = jnp.sum(xc * xc, axis=0, keepdims=True) * inv_n
        y = xc * jax.lax.rsqrt(var + 1e-5) * g_ref[...] + b_ref[...]
        if has_res:
            y = y + r_ref[...].astype(jnp.float32)                  # fused residual
        if relu:
            y = jnp.maximum(y, 0.0)
        o_ref[...] = y.astype(o_ref.dtype)


@functools.partial(jax.jit, static_argnames=("relu",))
def matmul_bn_fused(a, w_q, w_s, gamma, beta, residual=None, relu=True):
    """Conv-as-matmul with batch-norm / residual / ReLU fused.  a:(M,K)."""
    M, K = a.shape
    _, N = w_q.shape
    a = a.astype(jnp.bfloat16)

    Mp = _rup(M, 8)
    Kp = _rup(K, 128)
    Np = _rup(N, 128)
    tn = 256 if Np % 256 == 0 else 128
    tk = _pick_tk(Kp)

    a_p = jnp.pad(a, ((0, Mp - M), (0, Kp - K)))
    w_p = jnp.pad(w_q, ((0, Kp - K), (0, Np - N)))
    ws_p = jnp.pad(w_s, ((0, 0), (0, Np - N)))
    g_p = jnp.pad(gamma.reshape(1, -1).astype(jnp.float32), ((0, 0), (0, Np - N)))
    b_p = jnp.pad(beta.reshape(1, -1).astype(jnp.float32), ((0, 0), (0, Np - N)))

    has_res = residual is not None
    inputs = [a_p, w_p, ws_p, g_p, b_p]
    in_specs = [
        pl.BlockSpec((Mp, tk), lambda j, k: (0, k)),
        pl.BlockSpec((tk, tn), lambda j, k: (k, j)),
        pl.BlockSpec((1, tn), lambda j, k: (0, j)),
        pl.BlockSpec((1, tn), lambda j, k: (0, j)),
        pl.BlockSpec((1, tn), lambda j, k: (0, j)),
    ]
    if has_res:
        r_p = jnp.pad(residual.astype(jnp.bfloat16), ((0, Mp - M), (0, Np - N)))
        inputs.append(r_p)
        in_specs.append(pl.BlockSpec((Mp, tn), lambda j, k: (0, j)))

    # TODO(synk): on v7x the small (j,k) grid leaves the second TensorCore
    # idle; splitting K across cores (core_map) would help the weight-bound
    # layers there.
    out = pl.pallas_call(
        functools.partial(_mm_bn_kernel, relu=relu, has_res=has_res, m_rows=M),
        out_shape=jax.ShapeDtypeStruct((Mp, Np), jnp.bfloat16),
        grid_spec=pltpu.PrefetchScalarGridSpec(
            num_scalar_prefetch=0,
            grid=(Np // tn, Kp // tk),
            in_specs=in_specs,
            out_specs=pl.BlockSpec((Mp, tn), lambda j, k: (0, j)),
            scratch_shapes=[pltpu.VMEM((Mp, tn), jnp.float32)],
        ),
        compiler_params=pltpu.CompilerParams(
            dimension_semantics=("parallel", "arbitrary")),
    )(*inputs)
    return out[:M, :N]


# ---------------------------------------------------------------------------
# Pallas kernel 3: stand-alone batch-norm (stem only at this size).
# bf16 in/out, f32 statistics, optional residual / ReLU.
# ---------------------------------------------------------------------------
def _bn_kernel(x_ref, g_ref, b_ref, *rest, relu, count, has_res):
    if has_res:
        r_ref, o_ref = rest
    else:
        (o_ref,) = rest
    x = x_ref[...].astype(jnp.float32)                              # (M, tc)
    mean = jnp.sum(x, axis=0, keepdims=True) * (1.0 / count)
    xc = x - mean
    var = jnp.sum(xc * xc, axis=0, keepdims=True) * (1.0 / count)
    y = xc * jax.lax.rsqrt(var + 1e-5) * g_ref[...] + b_ref[...]
    if has_res:
        y = y + r_ref[...].astype(jnp.float32)
    if relu:
        y = jnp.maximum(y, 0.0)
    o_ref[...] = y.astype(o_ref.dtype)


@functools.partial(jax.jit, static_argnames=("relu",))
def batchnorm_act(x2d, gamma, beta, residual=None, relu=True):
    """x2d:(M=N*H*W, C) bf16 -> bf16.  Batch-stat BN + affine (+res/ReLU)."""
    # TODO(synk): for large inputs (224x224, big batch) the (M, tc) block must
    # be row-tiled (two-pass stats) to fit v7x's 64 MiB VMEM; fine at this size.
    M, C = x2d.shape
    tc = 128 if C % 128 == 0 else C
    g = gamma.reshape(1, -1).astype(jnp.float32)
    b = beta.reshape(1, -1).astype(jnp.float32)
    has_res = residual is not None

    inputs = [x2d.astype(jnp.bfloat16), g, b]
    in_specs = [
        pl.BlockSpec((M, tc), lambda j: (0, j)),
        pl.BlockSpec((1, tc), lambda j: (0, j)),
        pl.BlockSpec((1, tc), lambda j: (0, j)),
    ]
    if has_res:
        inputs.append(residual.astype(jnp.bfloat16))
        in_specs.append(pl.BlockSpec((M, tc), lambda j: (0, j)))

    out = pl.pallas_call(
        functools.partial(_bn_kernel, relu=relu, count=float(M), has_res=has_res),
        out_shape=jax.ShapeDtypeStruct((M, C), jnp.bfloat16),
        grid_spec=pltpu.PrefetchScalarGridSpec(
            num_scalar_prefetch=0,
            grid=(C // tc,),
            in_specs=in_specs,
            out_specs=pl.BlockSpec((M, tc), lambda j: (0, j)),
        ),
        compiler_params=pltpu.CompilerParams(dimension_semantics=("parallel",)),
    )(*inputs)
    return out


# ---------------------------------------------------------------------------
# Pallas kernel 4: ArcMarginProduct (easy_margin=True)
#   operands are pre-normalized (query in wrapper, weight at param build),
#   weight stored transposed (K, Np) bf16; 1536-wide lane-dense output tiles.
# ---------------------------------------------------------------------------
S_ARC = 30.0
M_ARC = 0.6
COS_M = math.cos(M_ARC)
SIN_M = math.sin(M_ARC)
N_CLASSES = 15201
ARC_TN = 1536


def _arcface_kernel(xn_ref, wn_ref, lab_ref, o_ref, *, s, cos_m, sin_m, tn):
    j = pl.program_id(0)
    cos = jnp.dot(xn_ref[...], wn_ref[...],
                  preferred_element_type=jnp.float32)               # (B, tn)
    sin = jnp.sqrt(jnp.clip(1.0 - cos * cos, 0.0, 1.0))
    phi = cos * cos_m - sin * sin_m
    phi = jnp.where(cos > 0.0, phi, cos)                            # easy_margin=True
    col = jax.lax.broadcasted_iota(jnp.int32, cos.shape, 1) + j * tn
    one_hot = (col == lab_ref[...]).astype(cos.dtype)               # lab: (B,1)
    o_ref[...] = (one_hot * phi + (1.0 - one_hot) * cos) * s


@jax.jit
def arcface_forward(x, wn_t, label):
    """x:(B,1024) f32, wn_t:(1024, Np) bf16 pre-normalized, label:(B,) int."""
    B, K = x.shape
    Np = wn_t.shape[1]
    tn = ARC_TN
    # hoisted query normalization (done once, not per output tile)
    xn = (x * jax.lax.rsqrt(jnp.maximum(jnp.sum(x * x, axis=1, keepdims=True),
                                        1e-24))).astype(jnp.bfloat16)
    lab = label.reshape(B, 1).astype(jnp.int32)
    out = pl.pallas_call(
        functools.partial(_arcface_kernel, s=S_ARC, cos_m=COS_M, sin_m=SIN_M,
                          tn=tn),
        out_shape=jax.ShapeDtypeStruct((B, Np), jnp.float32),
        grid_spec=pltpu.PrefetchScalarGridSpec(
            num_scalar_prefetch=0,
            grid=(Np // tn,),
            in_specs=[
                pl.BlockSpec((B, K), lambda j: (0, 0)),
                pl.BlockSpec((K, tn), lambda j: (0, j)),
                pl.BlockSpec((B, 1), lambda j: (0, 0)),
            ],
            out_specs=pl.BlockSpec((B, tn), lambda j: (0, j)),
        ),
        compiler_params=pltpu.CompilerParams(dimension_semantics=("parallel",)),
    )(xn, wn_t, lab)
    return out[:, :N_CLASSES]


# ---------------------------------------------------------------------------
# Glue: im2col, maxpool, conv wrapper, bottleneck, params, forward
# ---------------------------------------------------------------------------
def im2col(x, kh, kw, stride, pad):
    # TODO(synk): im2col is still materialized; fusing the (kh,kw) offsets into
    # the matmul index_map would remove the 9x duplication for 3x3 convs at
    # large input sizes.
    N, H, W, C = x.shape
    xp = jnp.pad(x, ((0, 0), (pad, pad), (pad, pad), (0, 0)))
    Ho = (H + 2 * pad - kh) // stride + 1
    Wo = (W + 2 * pad - kw) // stride + 1
    cols = []
    for i in range(kh):
        for j in range(kw):
            cols.append(xp[:, i:i + stride * Ho:stride, j:j + stride * Wo:stride, :])
    patches = jnp.stack(cols, axis=3)                               # (N,Ho,Wo,kh*kw,C)
    return patches.reshape(N * Ho * Wo, kh * kw * C), (N, Ho, Wo)


def maxpool2d(x, k=3, stride=2, pad=1):
    # TODO(synk): maxpool kept in plain JAX (tiny vs the conv hot path)
    N, H, W, C = x.shape
    xp = jnp.pad(x, ((0, 0), (pad, pad), (pad, pad), (0, 0)),
                 constant_values=-jnp.inf)
    Ho = (H + 2 * pad - k) // stride + 1
    Wo = (W + 2 * pad - k) // stride + 1
    out = None
    for i in range(k):
        for j in range(k):
            p = xp[:, i:i + stride * Ho:stride, j:j + stride * Wo:stride, :]
            out = p if out is None else jnp.maximum(out, p)
    return out


@functools.partial(jax.jit, static_argnames=("kh", "kw", "stride", "pad", "relu"))
def conv_bn_act(x, w_q, w_s, gamma, beta, kh, kw, stride, pad, relu=True,
                residual=None):
    patches, (N, Ho, Wo) = im2col(x.astype(jnp.bfloat16), kh, kw, stride, pad)
    M = patches.shape[0]
    cout = gamma.shape[0]
    if _rup(M, 8) <= 128:
        # BN/residual/ReLU fused into the matmul epilogue (single M tile)
        y = matmul_bn_fused(patches, w_q, w_s, gamma, beta,
                            residual=residual, relu=relu)
    else:
        y = matmul_q(patches, w_q, w_s, relu=False, out_dtype=jnp.bfloat16)
        y = batchnorm_act(y, gamma, beta, residual=residual, relu=relu)
    return y.reshape(N, Ho, Wo, cout)


def bottleneck(x, p, stride, has_down):
    if has_down:
        identity = conv_bn_act(x, p['wd'][0], p['wd'][1], p['gd'], p['bd'],
                               1, 1, stride, 0, relu=False)
    else:
        identity = x
    res2d = identity.reshape(-1, identity.shape[-1])
    out = conv_bn_act(x, p['w1'][0], p['w1'][1], p['g1'], p['b1'],
                      1, 1, 1, 0, relu=True)
    out = conv_bn_act(out, p['w2'][0], p['w2'][1], p['g2'], p['b2'],
                      3, 3, stride, 1, relu=True)
    # residual add + final ReLU fused into conv3's matmul/BN epilogue
    out = conv_bn_act(out, p['w3'][0], p['w3'][1], p['g3'], p['b3'],
                      1, 1, 1, 0, relu=True, residual=res2d)
    return out


_ctr = itertools.count()
_BASE_KEY = jax.random.PRNGKey(0)


def _key():
    return jax.random.fold_in(_BASE_KEY, next(_ctr))


def conv_w(kh, kw, cin, cout):
    std = math.sqrt(2.0 / (kh * kw * cin))
    w = jax.random.normal(_key(), (kh * kw * cin, cout), jnp.float32) * std
    return quantize_w(w)                                            # (int8 codes, scale)


def make_bottleneck_params(cin, planes, has_down, base_width=128):
    width = planes * base_width // 64                               # wide: 2x width
    cout = planes * 4
    p = {
        'w1': conv_w(1, 1, cin, width),
        'g1': jnp.ones((width,), jnp.float32), 'b1': jnp.zeros((width,), jnp.float32),
        'w2': conv_w(3, 3, width, width),
        'g2': jnp.ones((width,), jnp.float32), 'b2': jnp.zeros((width,), jnp.float32),
        'w3': conv_w(1, 1, width, cout),
        'g3': jnp.ones((cout,), jnp.float32), 'b3': jnp.zeros((cout,), jnp.float32),
    }
    if has_down:
        p['wd'] = conv_w(1, 1, cin, cout)
        p['gd'] = jnp.ones((cout,), jnp.float32)
        p['bd'] = jnp.zeros((cout,), jnp.float32)
    return p


def make_params():
    # TODO(synk): pretrained ImageNet checkpoint cannot be loaded; weights are
    # deterministic synthetic values with the exact wide_resnet101_2 shapes.
    params = {
        'conv1': conv_w(7, 7, 3, 64),
        'bn1_g': jnp.ones((64,), jnp.float32),
        'bn1_b': jnp.zeros((64,), jnp.float32),
    }
    layers = []
    inplanes = 64
    for planes, blocks in zip([64, 128, 256, 512], [3, 4, 23, 3]):
        layer = []
        for b in range(blocks):
            cin = inplanes if b == 0 else planes * 4
            layer.append(make_bottleneck_params(cin, planes, has_down=(b == 0)))
        inplanes = planes * 4
        layers.append(layer)
    params['layers'] = layers
    # replaced resnet.fc : Linear(2048, 1024), int8-quantized like the convs
    fc_w = (jax.random.normal(_key(), (2048, 1024), jnp.float32)
            * math.sqrt(1.0 / 2048))
    params['fc_w'] = quantize_w(fc_w)
    params['fc_b'] = jnp.zeros((1024,), jnp.float32)
    # ArcMarginProduct weight (out_features=15201, in_features=1024), xavier_uniform.
    # Pre-normalize rows (same math F.normalize does in forward), transpose to
    # (K, N), pad N once to a multiple of the output tile, cast to bf16.
    bound = math.sqrt(6.0 / (N_CLASSES + 1024))
    arc_w = jax.random.uniform(_key(), (N_CLASSES, 1024), jnp.float32,
                               -bound, bound)
    arc_wn = arc_w / jnp.maximum(
        jnp.sqrt(jnp.sum(arc_w * arc_w, axis=1, keepdims=True)), 1e-12)
    Np = _rup(N_CLASSES, ARC_TN)
    params['arc_wn_t'] = jnp.pad(arc_wn.T,
                                 ((0, 0), (0, Np - N_CLASSES))).astype(jnp.bfloat16)
    return params


def cnn_forward(params, x_nchw, labels):
    # NCHW (PyTorch) -> NHWC
    x = jnp.transpose(x_nchw, (0, 2, 3, 1)).astype(jnp.float32)
    # stem (M too large for single-tile fusion -> matmul + separate BN kernel)
    x = conv_bn_act(x, params['conv1'][0], params['conv1'][1],
                    params['bn1_g'], params['bn1_b'], 7, 7, 2, 3, relu=True)
    x = maxpool2d(x, 3, 2, 1)
    # residual stages: layer1 stride 1, layers 2-4 stride 2
    for li, layer in enumerate(params['layers']):
        first_stride = 1 if li == 0 else 2
        for bi, p in enumerate(layer):
            x = bottleneck(x, p, first_stride if bi == 0 else 1,
                           has_down=(bi == 0))
    # adaptive avg pool to 1x1 + flatten
    x = jnp.mean(x.astype(jnp.float32), axis=(1, 2))                # (B, 2048)
    # resnet.fc replacement: Linear(2048, 1024) via Pallas matmul
    x = matmul_q(x, params['fc_w'][0], params['fc_w'][1], params['fc_b'],
                 relu=False, out_dtype=jnp.float32)                 # (B, 1024)
    # ArcFace head (easy_margin=True); torch `print(output)` side effect omitted
    # TODO(synk): training-mode BN running-stat updates are not modeled.
    return arcface_forward(x, params['arc_wn_t'], labels)           # (B, 15201)


if __name__ == "__main__":
    ikey = jax.random.PRNGKey(0)
    kx, ky = jax.random.split(ikey)
    x = jax.random.normal(kx, (2, 3, 32, 32), jnp.float32)          # NCHW like PyTorch
    y = jax.random.randint(ky, (2,), 0, N_CLASSES)
    params = make_params()
    out = cnn_forward(params, x, y)
    out = jax.block_until_ready(out)
    assert out.shape == (2, N_CLASSES) and out.dtype == jnp.float32
    print("KERNEL_OK")
</pallas_src>

<mosaic_0001>
module attributes {stable_mosaic.version = 11 : i64} {
  func.func @_mm_kernel(%arg0: i32, %arg1: i32, %arg2: i32, %arg3: memref<256x256xbf16, #tpu.memory_space<vmem>>, %arg4: memref<256x128xi8, #tpu.memory_space<vmem>>, %arg5: memref<1x128xf32, #tpu.memory_space<vmem>>, %arg6: memref<256x128xbf16, #tpu.memory_space<vmem>>, %arg7: memref<256x128xf32, #tpu.memory_space<vmem>>) attributes {dimension_semantics = [#tpu.dimension_semantics<parallel>, #tpu.dimension_semantics<parallel>, #tpu.dimension_semantics<arbitrary>], iteration_bounds = array<i64: 2, 1, 1>, scalar_prefetch = 0 : i64, scratch_operands = 1 : i64, tpu.core_type = #tpu.core_type<tc>, window_params = [{transform_indices = @transform_0, window_bounds = array<i64: 256, 256>}, {transform_indices = @transform_1, window_bounds = array<i64: 256, 128>}, {transform_indices = @transform_2, window_bounds = array<i64: 1, 128>}, {transform_indices = @transform_3, window_bounds = array<i64: 256, 128>}]} {
    %c0_i32 = arith.constant 0 : i32
    %0 = arith.cmpi eq, %arg2, %c0_i32 : i32
    %1 = arith.extui %0 : i1 to i32
    %c0_i32_0 = arith.constant 0 : i32
    %2 = arith.cmpi ne, %1, %c0_i32_0 : i32
    scf.if %2 {
      %cst_10 = arith.constant 0.000000e+00 : f32
      %14 = vector.broadcast %cst_10 : f32 to vector<256x128xf32>
      %c0_11 = arith.constant 0 : index
      %c0_12 = arith.constant 0 : index
      %15 = vector.load %arg7[%c0_11, %c0_12] : memref<256x128xf32, #tpu.memory_space<vmem>>, vector<256x128xf32>
      tpu.vector_store %arg7[%c0_11, %c0_12], %14 {strides = array<i32>} : memref<256x128xf32, #tpu.memory_space<vmem>>, vector<256x128xf32>,
    } else {
    }
    %c0 = arith.constant 0 : index
    %c0_1 = arith.constant 0 : index
    %3 = vector.load %arg4[%c0, %c0_1] : memref<256x128xi8, #tpu.memory_space<vmem>>, vector<256x128xi8>
    %4 = arith.sitofp %3 : vector<256x128xi8> to vector<256x128xf32>
    %5 = arith.truncf %4 : vector<256x128xf32> to vector<256x128xbf16>
    %c0_2 = arith.constant 0 : index
    %c0_3 = arith.constant 0 : index
    %6 = vector.load %arg7[%c0_2, %c0_3] : memref<256x128xf32, #tpu.memory_space<vmem>>, vector<256x128xf32>
    %c0_4 = arith.constant 0 : index
    %c0_5 = arith.constant 0 : index
    %7 = vector.load %arg3[%c0_4, %c0_5] : memref<256x256xbf16, #tpu.memory_space<vmem>>, vector<256x256xbf16>
    %cst = arith.constant dense<0.000000e+00> : vector<256x128xf32>
    %8 = tpu.matmul %7, %5, %cst {dimension_numbers = #tpu.dot_dimension_numbers<[1], [0], [0], [1], [0, 0, 1, 1], [], []>} : vector<256x256xbf16>, vector<256x128xbf16>, vector<256x128xf32> -> vector<256x128xf32>
    %9 = arith.addf %6, %8 : vector<256x128xf32>
    %c0_6 = arith.constant 0 : index
    %c0_7 = arith.constant 0 : index
    %10 = vector.load %arg7[%c0_6, %c0_7] : memref<256x128xf32, #tpu.memory_space<vmem>>, vector<256x128xf32>
    tpu.vector_store %arg7[%c0_6, %c0_7], %9 {strides = array<i32>} : memref<256x128xf32, #tpu.memory_space<vmem>>, vector<256x128xf32>,
    %c0_i32_8 = arith.constant 0 : i32
    %11 = arith.cmpi eq, %arg2, %c0_i32_8 : i32
    %12 = arith.extui %11 : i1 to i32
    %c0_i32_9 = arith.constant 0 : i32
    %13 = arith.cmpi ne, %12, %c0_i32_9 : i32
    scf.if %13 {
      %c0_10 = arith.constant 0 : index
      %c0_11 = arith.constant 0 : index
      %14 = vector.load %arg7[%c0_10, %c0_11] : memref<256x128xf32, #tpu.memory_space<vmem>>, vector<256x128xf32>
      %c0_12 = arith.constant 0 : index
      %c0_13 = arith.constant 0 : index
      %15 = vector.load %arg5[%c0_12, %c0_13] : memref<1x128xf32, #tpu.memory_space<vmem>>, vector<1x128xf32>
      %16 = vector.broadcast %15 : vector<1x128xf32> to vector<256x128xf32>
      %17 = arith.mulf %14, %16 : vector<256x128xf32>
      %18 = arith.truncf %17 : vector<256x128xf32> to vector<256x128xbf16>
      %c0_14 = arith.constant 0 : index
      %c0_15 = arith.constant 0 : index
      %19 = vector.load %arg6[%c0_14, %c0_15] : memref<256x128xbf16, #tpu.memory_space<vmem>>, vector<256x128xbf16>
      tpu.vector_store %arg6[%c0_14, %c0_15], %18 {strides = array<i32>} : memref<256x128xbf16, #tpu.memory_space<vmem>>, vector<256x128xbf16>,
    } else {
    }
    return
  }
  func.func @transform_0(%arg0: i32, %arg1: i32, %arg2: i32) -> (i32, i32) {
    %c0_i32 = arith.constant 0 : i32
    return %arg0, %arg2 : i32, i32
  }
  func.func @transform_1(%arg0: i32, %arg1: i32, %arg2: i32) -> (i32, i32) {
    %c0_i32 = arith.constant 0 : i32
    return %arg2, %arg1 : i32, i32
  }
  func.func @transform_2(%arg0: i32, %arg1: i32, %arg2: i32) -> (i32, i32) {
    %c0_i32 = arith.constant 0 : i32
    %c0_i32_0 = arith.constant 0 : i32
    return %c0_i32, %arg1 : i32, i32
  }
  func.func @transform_3(%arg0: i32, %arg1: i32, %arg2: i32) -> (i32, i32) {
    %c0_i32 = arith.constant 0 : i32
    return %arg0, %arg1 : i32, i32
  }
}

</mosaic_0001>

<llo_original>
// kernel: matmul_q.1
$region0: #{matmul_q.1}
  #allocation0 [shape = 'u32[]', space=smem, size = 0x4, offset = 0x4, fixed_abs, tag = 'smem constant byte address 0x4 - core index']
  #allocation1 [shape = 'u32[72,128]{1,0:T(1,128)}', space=vmem, size = 0x9000, scoped, tag = 'internal scratch']
  #allocation2 [shape = 'f32[256,128]{1,0:T(8,128)}', space=vmem, size = 0x20000, scoped, tag = 'scratch operand']
  %s0 = inlined_call_operand.vmem [shape: bf16[512,256], index: 0, kind: input, shape index: {}]
  %s1 = inlined_call_operand.vmem [shape: s8[256,128], index: 1, kind: input, shape index: {}]
  %s2 = inlined_call_operand.vmem [shape: f32[1,128], index: 2, kind: input, shape index: {}]
  %s3 = inlined_call_operand.vmem [shape: bf16[512,128], index: 3, kind: output, shape index: {}]
  %s4 = sld [smem:[#allocation0]]
  $region53: #{matmul_q.1} parent=0
    _
  %s6 = ssub.s32 1, %s4
  %s7 = scalar_select 0, %s6, %s4
  loop: start=0, step=1, limit=4
  $region2: #{matmul_q.1} parent=0 // loop_pre_header
    _
  $region3: #{matmul_q.1} parent=0 // loop_header
    %s9 = sphi 0, %s13
    %p10 = scmp.ge.s32.totalorder %s9, 4
    %s16 = sphi 0, %s35
    %s17 = sphi 0, %s31
    %s18 = sphi 0, %s27
    %s19 = sphi 0, %s16
    %s20 = sphi 0, %s17
    %s21 = sphi 0, %s18
    %s22 = sphi 0, %s19
    %s23 = sphi 0, %s20
    %s24 = sphi 0, %s21
    %s40 = sphi 0, %s42
    %s43 = sphi 0, %s40
    %s44 = sphi 0, %s43
    %s60 = sphi 0, %s44
    %s68 = sphi 0, %s70
    %s71 = sphi 0, %s68
    %s72 = sphi 0, %s71
    %s88 = sphi 0, %s72
    %s94 = sphi 0, %s96
    %s97 = sphi 0, %s94
    %s98 = sphi 0, %s97
    %s114 = sphi 0, %s98
    %s122 = sphi 0, %s124
    %s125 = sphi 0, %s122
    %s126 = sphi 0, %s125
    %s142 = sphi 0, %s126
  $region4: #{matmul_q.1} parent=0 // loop_header_branch
    %12 = sbr.rel (%p10) target = $region8
  $region5: #{matmul_q.1} parent=0 // loop_body
    %s14 = ssub.s32 %s9, 1
    %s15 = ssub.s32 %s9, 2
    %s25 = sadd.s32 1, %s18
    %p26 = scmp.ge.s32.totalorder %s25, 1
    %s27 = scalar_select %p26, 0, %s25
    %s28 = sadd.s32 1, %s17
    %s29 = scalar_select %p26, %s28, %s17
    %p30 = scmp.ge.s32.totalorder %s29, 1
    %s31 = scalar_select %p30, 0, %s29
    %s32 = sadd.s32 1, %s16
    %s33 = scalar_select %p30, %s32, %s16
    %p34 = scmp.ge.s32.totalorder %s33, 2
    %s35 = scalar_select %p34, 0, %s33
    %s36 = ssub.s32 %s16, %s35
    %s37 = ssub.s32 %s18, %s27
    %s38 = sor.u32 %s36, %s37
    %p39 = scmp.eq.s32.totalorder %s38, 0
    %s41 = sadd.s32 %s40, 1
    %s42 = scalar_select %p39, %s40, %s41
    %p45 = pneg %p39
    %p46 = scmp.eq.s32.totalorder %s9, 1
    %p47 = por %p45, %p46
    %p48 = scmp.ne.s32.totalorder %s40, %s43
    %p49 = scmp.eq.s32.totalorder %s9, 0
    %p50 = por %p48, %p49
    %p51 = scmp.ne.s32.totalorder %s40, %s43
    %p52 = scmp.eq.s32.totalorder %s14, 1
    %p53 = por %p51, %p52
    %p54 = scmp.ne.s32.totalorder %s43, %s44
    %p55 = scmp.eq.s32.totalorder %s14, 0
    %p56 = por %p54, %p55
    %p57 = scmp.ne.s32.totalorder %s43, %s44
    %p58 = scmp.eq.s32.totalorder %s15, 1
    %p59 = por %p57, %p58
    %p61 = scmp.ne.s32.totalorder %s44, %s60
    %p62 = scmp.eq.s32.totalorder %s15, 0
    %p63 = por %p61, %p62
    %s64 = ssub.s32 %s18, %s27
    %s65 = ssub.s32 %s17, %s31
    %s66 = sor.u32 %s64, %s65
    %p67 = scmp.eq.s32.totalorder %s66, 0
    %s69 = sadd.s32 %s68, 1
    %s70 = scalar_select %p67, %s68, %s69
    %p73 = pneg %p67
    %p74 = scmp.eq.s32.totalorder %s9, 1
    %p75 = por %p73, %p74
    %p76 = scmp.ne.s32.totalorder %s68, %s71
    %p77 = scmp.eq.s32.totalorder %s9, 0
    %p78 = por %p76, %p77
    %p79 = scmp.ne.s32.totalorder %s68, %s71
    %p80 = scmp.eq.s32.totalorder %s14, 1
    %p81 = por %p79, %p80
    %p82 = scmp.ne.s32.totalorder %s71, %s72
    %p83 = scmp.eq.s32.totalorder %s14, 0
    %p84 = por %p82, %p83
    %p85 = scmp.ne.s32.totalorder %s71, %s72
    %p86 = scmp.eq.s32.totalorder %s15, 1
    %p87 = por %p85, %p86
    %p89 = scmp.ne.s32.totalorder %s72, %s88
    %p90 = scmp.eq.s32.totalorder %s15, 0
    %p91 = por %p89, %p90
    %s92 = ssub.s32 %s17, %s31
    %p93 = scmp.eq.s32.totalorder %s92, 0
    %s95 = sadd.s32 %s94, 1
    %s96 = scalar_select %p93, %s94, %s95
    %p99 = pneg %p93
    %p100 = scmp.eq.s32.totalorder %s9, 1
    %p101 = por %p99, %p100
    %p102 = scmp.ne.s32.totalorder %s94, %s97
    %p103 = scmp.eq.s32.totalorder %s9, 0
    %p104 = por %p102, %p103
    %p105 = scmp.ne.s32.totalorder %s94, %s97
    %p106 = scmp.eq.s32.totalorder %s14, 1
    %p107 = por %p105, %p106
    %p108 = scmp.ne.s32.totalorder %s97, %s98
    %p109 = scmp.eq.s32.totalorder %s14, 0
    %p110 = por %p108, %p109
    %p111 = scmp.ne.s32.totalorder %s97, %s98
    %p112 = scmp.eq.s32.totalorder %s15, 1
    %p113 = por %p111, %p112
    %p115 = scmp.ne.s32.totalorder %s98, %s114
    %p116 = scmp.eq.s32.totalorder %s15, 0
    %p117 = por %p115, %p116
    %s118 = ssub.s32 %s16, %s35
    %s119 = ssub.s32 %s17, %s31
    %s120 = sor.u32 %s118, %s119
    %p121 = scmp.eq.s32.totalorder %s120, 0
    %s123 = sadd.s32 %s122, 1
    %s124 = scalar_select %p121, %s122, %s123
    %p127 = pneg %p121
    %p128 = scmp.eq.s32.totalorder %s9, 1
    %p129 = por %p127, %p128
    %p130 = scmp.ne.s32.totalorder %s122, %s125
    %p131 = scmp.eq.s32.totalorder %s9, 0
    %p132 = por %p130, %p131
    %p133 = scmp.ne.s32.totalorder %s122, %s125
    %p134 = scmp.eq.s32.totalorder %s14, 1
    %p135 = por %p133, %p134
    %p136 = scmp.ne.s32.totalorder %s125, %s126
    %p137 = scmp.eq.s32.totalorder %s14, 0
    %p138 = por %p136, %p137
    %p139 = scmp.ne.s32.totalorder %s125, %s126
    %p140 = scmp.eq.s32.totalorder %s15, 1
    %p141 = por %p139, %p140
    %p143 = scmp.ne.s32.totalorder %s126, %s142
    %p144 = scmp.eq.s32.totalorder %s15, 0
    %p145 = por %p143, %p144
    %p146 = scmp.le.s32.totalorder 1, %s9
    %p147 = scmp.lt.s32.totalorder %s9, 3
    %p148 = pnand %p146, %p147
    %p149 = pneg %p148
    // Predicated region
    $region9: #{matmul_q.1} parent=5 // pred_check
      _
    $region10: #{matmul_q.1} parent=5 // pred_check_branch
      %151 = sbr.rel (%p148) target = $region12
    $region11: #{matmul_q.1} parent=5 // pred_region
      %s152 = ssub.s32 %s9, 1
      // Predicated region
      $region13: #{matmul_q.1} parent=11 // pred_check
        %p153 = pneg %p84
      $region14: #{matmul_q.1} parent=11 // pred_check_branch
        %155 = sbr.rel (%p153) target = $region16
      $region15: #{matmul_q.1} parent=11 // pred_region
        %s156 = smul.u32 8, %s21
        %p157 = scmp.lt.s32.totalorder %s156, 7
        %s158 = scalar_select %p157, %s156, 7
        %p159 = scmp.lt.s32.totalorder %s20, 0
        %s160 = scalar_select %p159, %s20, 0
        %s161 = sadd.s32 %s160, %s158
        %s162 = smul.addr %s161, 8
        %s163 = scalar_lea.vmem %s1, %s162
        %s164 = smul.u32 8, %s21
      $region16: #{matmul_q.1} parent=11 // pred_fallthru
        _
      // Predicated region
      $region17: #{matmul_q.1} parent=11 // pred_check
        %p165 = pneg %p110
      $region18: #{matmul_q.1} parent=11 // pred_check_branch
        %167 = sbr.rel (%p165) target = $region20
      $region19: #{matmul_q.1} parent=11 // pred_region
        %p168 = scmp.lt.s32.totalorder %s20, 0
        %s169 = scalar_select %p168, %s20, 0
        %s170 = scalar_lea.vmem %s2, %s169
      $region20: #{matmul_q.1} parent=11 // pred_fallthru
        _
    $region12: #{matmul_q.1} parent=5 // pred_fallthru
      _
    %p171 = scmp.lt.s32.totalorder %s9, 2
    // Predicated region
    $region21: #{matmul_q.1} parent=5 // pred_check
      %p172 = pneg %p171
    $region22: #{matmul_q.1} parent=5 // pred_check_branch
      %174 = sbr.rel (%p172) target = $region24
    $region23: #{matmul_q.1} parent=5 // pred_region
      // Predicated region
      $region25: #{matmul_q.1} parent=23 // pred_check
        %p175 = pneg %p50
      $region26: #{matmul_q.1} parent=23 // pred_check_branch
        %177 = sbr.rel (%p175) target = $region28
      $region27: #{matmul_q.1} parent=23 // pred_region
        %s178 = smul.u32 32, %s16
        %s179 = smul.u32 2, %s18
        %p180 = scmp.lt.s32.totalorder %s178, 63
        %s181 = scalar_select %p180, %s178, 63
        %p182 = scmp.lt.s32.totalorder %s179, 1
        %s183 = scalar_select %p182, %s179, 1
        %s184 = smul.addr %s181, 2
        %s185 = sadd.s32 %s183, %s184
        %s186 = smul.addr %s185, 4
        %s187 = scalar_lea.vmem %s0, %s186
        %s188 = smul.u32 32, %s16
        %s189 = smul.u32 2, %s18
      $region28: #{matmul_q.1} parent=23 // pred_fallthru
        _
    $region24: #{matmul_q.1} parent=5 // pred_fallthru
      _
    %p190 = scmp.le.s32.totalorder 1, %s9
    %p191 = scmp.lt.s32.totalorder %s9, 3
    %p192 = pnand %p190, %p191
    %p193 = pneg %p192
    // Predicated region
    $region29: #{matmul_q.1} parent=5 // pred_check
      _
    $region30: #{matmul_q.1} parent=5 // pred_check_branch
      %195 = sbr.rel (%p192) target = $region32
    $region31: #{matmul_q.1} parent=5 // pred_region
      %s196 = ssub.s32 %s9, 1
      %s197 = smul.u32 32, %s19
      %s198 = smul.u32 2, %s21
      %p199 = scmp.lt.s32.totalorder %s197, 63
      %s200 = scalar_select %p199, %s197, 63
      %p201 = scmp.lt.s32.totalorder %s198, 1
      %s202 = scalar_select %p201, %s198, 1
      %s203 = smul.addr %s200, 2
      %s204 = sadd.s32 %s202, %s203
      %s205 = smul.addr %s204, 4
      %s206 = scalar_lea.vmem %s0, %s205
      %p207 = pneg %p56
      %p208 = pneg %p53
      %s209 = smul.u32 8, %s21
      %p210 = scmp.lt.s32.totalorder %s209, 7
      %s211 = scalar_select %p210, %s209, 7
      %p212 = scmp.lt.s32.totalorder %s20, 0
      %s213 = scalar_select %p212, %s20, 0
      %s214 = sadd.s32 %s213, %s211
      %s215 = smul.addr %s214, 8
      %s216 = scalar_lea.vmem %s1, %s215
      %p217 = pneg %p84
      %p218 = pneg %p81
      %p219 = scmp.lt.s32.totalorder %s20, 0
      %s220 = scalar_select %p219, %s20, 0
      %s221 = scalar_lea.vmem %s2, %s220
      %p222 = pneg %p110
      %p223 = pneg %p107
      %p224 = pneg %p138
      %p225 = pneg %p135
      %s226 = smul.u32 32, %s19
      %p227 = scmp.lt.s32.totalorder %s226, 63
      %s228 = scalar_select %p227, %s226, 63
      %p229 = scmp.lt.s32.totalorder %s20, 0
      %s230 = scalar_select %p229, %s20, 0
      %s231 = sadd.s32 %s230, %s228
      %s232 = smul.addr %s231, 4
      %s233 = scalar_lea.vmem %s3, %s232
      %s234 = smul.u32 32, %s19
      %s235 = smul.u32 2, %s21
      %p236 = scmp.lt.s32.totalorder %s234, 63
      %s237 = scalar_select %p236, %s234, 63
      %p238 = scmp.lt.s32.totalorder %s235, 1
      %s239 = scalar_select %p238, %s235, 1
      %s240 = smul.addr %s237, 2
      %s241 = sadd.s32 %s239, %s240
      %s242 = smul.addr %s241, 4
      %s243 = scalar_lea.vmem %s0, %s242
      %s244 = smul.u32 32, %s19
      %s245 = smul.u32 2, %s21
      %s246 = smul.u32 8, %s21
      %p247 = scmp.lt.s32.totalorder %s246, 7
      %s248 = scalar_select %p247, %s246, 7
      %p249 = scmp.lt.s32.totalorder %s20, 0
      %s250 = scalar_select %p249, %s20, 0
      %s251 = sadd.s32 %s250, %s248
      %s252 = smul.addr %s251, 8
      %s253 = scalar_lea.vmem %s1, %s252
      %s254 = smul.u32 8, %s21
      %p255 = scmp.lt.s32.totalorder %s20, 0
      %s256 = scalar_select %p255, %s20, 0
      %s257 = scalar_lea.vmem %s2, %s256
      %s258 = smul.u32 32, %s19
      %p259 = scmp.lt.s32.totalorder %s258, 63
      %s260 = scalar_select %p259, %s258, 63
      %p261 = scmp.lt.s32.totalorder %s20, 0
      %s262 = scalar_select %p261, %s20, 0
      %s263 = sadd.s32 %s262, %s260
      %s264 = smul.addr %s263, 4
      %s265 = scalar_lea.vmem %s3, %s264
      %s266 = smul.u32 32, %s19
      %p267 = scmp.eq.s32.totalorder %s21, 0
      // Predicated region
      $region33: #{matmul_q.1} parent=31 // pred_check
        %p268 = pneg %p267
      $region34: #{matmul_q.1} parent=31 // pred_check_branch
        %270 = sbr.rel (%p268) target = $region36
      $region35: #{matmul_q.1} parent=31 // pred_region
        %271 = vst [vmem:[#allocation2] sm:$0xff] 0.0
        %272 = vst [vmem:[#allocation2 + $0x8] sm:$0xff] 0.0
        %273 = vst [vmem:[#allocation2 + $0x10] sm:$0xff] 0.0
        %274 = vst [vmem:[#allocation2 + $0x18] sm:$0xff] 0.0
        %275 = vst [vmem:[#allocation2 + $0x20] sm:$0xff] 0.0
        %276 = vst [vmem:[#allocation2 + $0x28] sm:$0xff] 0.0
        %277 = vst [vmem:[#allocation2 + $0x30] sm:$0xff] 0.0
        %278 = vst [vmem:[#allocation2 + $0x38] sm:$0xff] 0.0
        %279 = vst [vmem:[#allocation2 + $0x40] sm:$0xff] 0.0
        %280 = vst [vmem:[#allocation2 + $0x48] sm:$0xff] 0.0
        %281 = vst [vmem:[#allocation2 + $0x50] sm:$0xff] 0.0
        %282 = vst [vmem:[#allocation2 + $0x58] sm:$0xff] 0.0
        %283 = vst [vmem:[#allocation2 + $0x60] sm:$0xff] 0.0
        %284 = vst [vmem:[#allocation2 + $0x68] sm:$0xff] 0.0
        %285 = vst [vmem:[#allocation2 + $0x70] sm:$0xff] 0.0
        %286 = vst [vmem:[#allocation2 + $0x78] sm:$0xff] 0.0
        %287 = vst [vmem:[#allocation2 + $0x80] sm:$0xff] 0.0
        %288 = vst [vmem:[#allocation2 + $0x88] sm:$0xff] 0.0
        %289 = vst [vmem:[#allocation2 + $0x90] sm:$0xff] 0.0
        %290 = vst [vmem:[#allocation2 + $0x98] sm:$0xff] 0.0
        %291 = vst [vmem:[#allocation2 + $0xa0] sm:$0xff] 0.0
        %292 = vst [vmem:[#allocation2 + $0xa8] sm:$0xff] 0.0
        %293 = vst [vmem:[#allocation2 + $0xb0] sm:$0xff] 0.0
        %294 = vst [vmem:[#allocation2 + $0xb8] sm:$0xff] 0.0
        %295 = vst [vmem:[#allocation2 + $0xc0] sm:$0xff] 0.0
        %296 = vst [vmem:[#allocation2 + $0xc8] sm:$0xff] 0.0
        %297 = vst [vmem:[#allocation2 + $0xd0] sm:$0xff] 0.0
        %298 = vst [vmem:[#allocation2 + $0xd8] sm:$0xff] 0.0
        %299 = vst [vmem:[#allocation2 + $0xe0] sm:$0xff] 0.0
        %300 = vst [vmem:[#allocation2 + $0xe8] sm:$0xff] 0.0
        %301 = vst [vmem:[#allocation2 + $0xf0] sm:$0xff] 0.0
        %302 = vst [vmem:[#allocation2 + $0xf8] sm:$0xff] 0.0
      $region36: #{matmul_q.1} parent=31 // pred_fallthru
        _
      %v303 = vld [vmem:[%s253] sm:$0xff]
      %v304 = vld [vmem:[%s253 + $0x8] sm:$0xff]
      %v305 = vld [vmem:[%s253 + $0x10] sm:$0xff]
      %v306 = vld [vmem:[%s253 + $0x18] sm:$0xff]
      %v307 = vld [vmem:[%s253 + $0x20] sm:$0xff]
      %v308 = vld [vmem:[%s253 + $0x28] sm:$0xff]
      %v309 = vld [vmem:[%s253 + $0x30] sm:$0xff]
      %v310 = vld [vmem:[%s253 + $0x38] sm:$0xff]
      %v311 = vunpack.c.0.s8 %v303
      %v312 = vunpack.c.1.s8 %v303
      %v313 = vunpack.c.2.s8 %v303
      %v314 = vunpack.c.3.s8 %v303
      %v315 = vunpack.c.0.s8 %v304
      %v316 = vunpack.c.1.s8 %v304
      %v317 = vunpack.c.2.s8 %v304
      %v318 = vunpack.c.3.s8 %v304
      %v319 = vunpack.c.0.s8 %v305
      %v320 = vunpack.c.1.s8 %v305
      %v321 = vunpack.c.2.s8 %v305
      %v322 = vunpack.c.3.s8 %v305
      %v323 = vunpack.c.0.s8 %v306
      %v324 = vunpack.c.1.s8 %v306
      %v325 = vunpack.c.2.s8 %v306
      %v326 = vunpack.c.3.s8 %v306
      %v327 = vunpack.c.0.s8 %v307
      %v328 = vunpack.c.1.s8 %v307
      %v329 = vunpack.c.2.s8 %v307
      %v330 = vunpack.c.3.s8 %v307
      %v331 = vunpack.c.0.s8 %v308
      %v332 = vunpack.c.1.s8 %v308
      %v333 = vunpack.c.2.s8 %v308
      %v334 = vunpack.c.3.s8 %v308
      %v335 = vunpack.c.0.s8 %v309
      %v336 = vunpack.c.1.s8 %v309
      %v337 = vunpack.c.2.s8 %v309
      %v338 = vunpack.c.3.s8 %v309
      %v339 = vunpack.c.0.s8 %v310
      %v340 = vunpack.c.1.s8 %v310
      %v341 = vunpack.c.2.s8 %v310
      %v342 = vunpack.c.3.s8 %v310
      %v343 = vcvt.s32.f32 %v311
      %v344 = vcvt.s32.f32 %v312
      %v345 = vcvt.s32.f32 %v313
      %v346 = vcvt.s32.f32 %v314
      %v347 = vcvt.s32.f32 %v315
      %v348 = vcvt.s32.f32 %v316
      %v349 = vcvt.s32.f32 %v317
      %v350 = vcvt.s32.f32 %v318
      %v351 = vcvt.s32.f32 %v319
      %v352 = vcvt.s32.f32 %v320
      %v353 = vcvt.s32.f32 %v321
      %v354 = vcvt.s32.f32 %v322
      %v355 = vcvt.s32.f32 %v323
      %v356 = vcvt.s32.f32 %v324
      %v357 = vcvt.s32.f32 %v325
      %v358 = vcvt.s32.f32 %v326
      %v359 = vcvt.s32.f32 %v327
      %v360 = vcvt.s32.f32 %v328
      %v361 = vcvt.s32.f32 %v329
      %v362 = vcvt.s32.f32 %v330
      %v363 = vcvt.s32.f32 %v331
      %v364 = vcvt.s32.f32 %v332
      %v365 = vcvt.s32.f32 %v333
      %v366 = vcvt.s32.f32 %v334
      %v367 = vcvt.s32.f32 %v335
      %v368 = vcvt.s32.f32 %v336
      %v369 = vcvt.s32.f32 %v337
      %v370 = vcvt.s32.f32 %v338
      %v371 = vcvt.s32.f32 %v339
      %v372 = vcvt.s32.f32 %v340
      %v373 = vcvt.s32.f32 %v341
      %v374 = vcvt.s32.f32 %v342
      %v375 = vpack.c.bf16 %v344, %v343
      %v376 = vpack.c.bf16 %v346, %v345
      %v377 = vpack.c.bf16 %v348, %v347
      %v378 = vpack.c.bf16 %v350, %v349
      %v379 = vpack.c.bf16 %v352, %v351
      %v380 = vpack.c.bf16 %v354, %v353
      %v381 = vpack.c.bf16 %v356, %v355
      %v382 = vpack.c.bf16 %v358, %v357
      %v383 = vpack.c.bf16 %v360, %v359
      %v384 = vpack.c.bf16 %v362, %v361
      %v385 = vpack.c.bf16 %v364, %v363
      %v386 = vpack.c.bf16 %v366, %v365
      %v387 = vpack.c.bf16 %v368, %v367
      %v388 = vpack.c.bf16 %v370, %v369
      %v389 = vpack.c.bf16 %v372, %v371
      %v390 = vpack.c.bf16 %v374, %v373
      %v391 = vld [vmem:[#allocation2] sm:$0xff]
      %v392 = vld [vmem:[#allocation2 + $0x8] sm:$0xff]
      %v393 = vld [vmem:[#allocation2 + $0x10] sm:$0xff]
      %v394 = vld [vmem:[#allocation2 + $0x18] sm:$0xff]
      %v395 = vld [vmem:[#allocation2 + $0x20] sm:$0xff]
      %v396 = vld [vmem:[#allocation2 + $0x28] sm:$0xff]
      %v397 = vld [vmem:[#allocation2 + $0x30] sm:$0xff]
      %v398 = vld [vmem:[#allocation2 + $0x38] sm:$0xff]
      %v399 = vld [vmem:[#allocation2 + $0x40] sm:$0xff]
      %v400 = vld [vmem:[#allocation2 + $0x48] sm:$0xff]
      %v401 = vld [vmem:[#allocation2 + $0x50] sm:$0xff]
      %v402 = vld [vmem:[#allocation2 + $0x58] sm:$0xff]
      %v403 = vld [vmem:[#allocation2 + $0x60] sm:$0xff]
      %v404 = vld [vmem:[#allocation2 + $0x68] sm:$0xff]
      %v405 = vld [vmem:[#allocation2 + $0x70] sm:$0xff]
      %v406 = vld [vmem:[#allocation2 + $0x78] sm:$0xff]
      %v407 = vld [vmem:[#allocation2 + $0x80] sm:$0xff]
      %v408 = vld [vmem:[#allocation2 + $0x88] sm:$0xff]
      %v409 = vld [vmem:[#allocation2 + $0x90] sm:$0xff]
      %v410 = vld [vmem:[#allocation2 + $0x98] sm:$0xff]
      %v411 = vld [vmem:[#allocation2 + $0xa0] sm:$0xff]
      %v412 = vld [vmem:[#allocation2 + $0xa8] sm:$0xff]
      %v413 = vld [vmem:[#allocation2 + $0xb0] sm:$0xff]
      %v414 = vld [vmem:[#allocation2 + $0xb8] sm:$0xff]
      %v415 = vld [vmem:[#allocation2 + $0xc0] sm:$0xff]
      %v416 = vld [vmem:[#allocation2 + $0xc8] sm:$0xff]
      %v417 = vld [vmem:[#allocation2 + $0xd0] sm:$0xff]
      %v418 = vld [vmem:[#allocation2 + $0xd8] sm:$0xff]
      %v419 = vld [vmem:[#allocation2 + $0xe0] sm:$0xff]
      %v420 = vld [vmem:[#allocation2 + $0xe8] sm:$0xff]
      %v421 = vld [vmem:[#allocation2 + $0xf0] sm:$0xff]
      %v422 = vld [vmem:[#allocation2 + $0xf8] sm:$0xff]
      %v423 = vld [vmem:[%s243] sm:$0xff]
      %v424 = vld [vmem:[%s243 + $0x8] sm:$0xff]
      %v425 = vld [vmem:[%s243 + $0x10] sm:$0xff]
      %v426 = vld [vmem:[%s243 + $0x18] sm:$0xff]
      %v427 = vld [vmem:[%s243 + $0x20] sm:$0xff]
      %v428 = vld [vmem:[%s243 + $0x28] sm:$0xff]
      %v429 = vld [vmem:[%s243 + $0x30] sm:$0xff]
      %v430 = vld [vmem:[%s243 + $0x38] sm:$0xff]
      %v431 = vld [vmem:[%s243 + $0x40] sm:$0xff]
      %v432 = vld [vmem:[%s243 + $0x48] sm:$0xff]
      %v433 = vld [vmem:[%s243 + $0x50] sm:$0xff]
      %v434 = vld [vmem:[%s243 + $0x58] sm:$0xff]
      %v435 = vld [vmem:[%s243 + $0x60] sm:$0xff]
      %v436 = vld [vmem:[%s243 + $0x68] sm:$0xff]
      %v437 = vld [vmem:[%s243 + $0x70] sm:$0xff]
      %v438 = vld [vmem:[%s243 + $0x78] sm:$0xff]
      %v439 = vld [vmem:[%s243 + $0x80] sm:$0xff]
      %v440 = vld [vmem:[%s243 + $0x88] sm:$0xff]
      %v441 = vld [vmem:[%s243 + $0x90] sm:$0xff]
      %v442 = vld [vmem:[%s243 + $0x98] sm:$0xff]
      %v443 = vld [vmem:[%s243 + $0xa0] sm:$0xff]
      %v444 = vld [vmem:[%s243 + $0xa8] sm:$0xff]
      %v445 = vld [vmem:[%s243 + $0xb0] sm:$0xff]
      %v446 = vld [vmem:[%s243 + $0xb8] sm:$0xff]
      %v447 = vld [vmem:[%s243 + $0xc0] sm:$0xff]
      %v448 = vld [vmem:[%s243 + $0xc8] sm:$0xff]
      %v449 = vld [vmem:[%s243 + $0xd0] sm:$0xff]
      %v450 = vld [vmem:[%s243 + $0xd8] sm:$0xff]
      %v451 = vld [vmem:[%s243 + $0xe0] sm:$0xff]
      %v452 = vld [vmem:[%s243 + $0xe8] sm:$0xff]
      %v453 = vld [vmem:[%s243 + $0xf0] sm:$0xff]
      %v454 = vld [vmem:[%s243 + $0xf8] sm:$0xff]
      %v487 = vunpack.c.l.b16 %v423
      %v488 = vunpack.c.h.b16 %v423
      %v489 = vunpack.c.l.b16 %v424
      %v490 = vunpack.c.h.b16 %v424
      %v491 = vunpack.c.l.b16 %v425
      %v492 = vunpack.c.h.b16 %v425
      %v493 = vunpack.c.l.b16 %v426
      %v494 = vunpack.c.h.b16 %v426
      %v495 = vunpack.c.l.b16 %v427
      %v496 = vunpack.c.h.b16 %v427
      %v497 = vunpack.c.l.b16 %v428
      %v498 = vunpack.c.h.b16 %v428
      %v499 = vunpack.c.l.b16 %v429
      %v500 = vunpack.c.h.b16 %v429
      %v501 = vunpack.c.l.b16 %v430
      %v502 = vunpack.c.h.b16 %v430
      %v503 = vunpack.c.l.b16 %v431
      %v504 = vunpack.c.h.b16 %v431
      %v505 = vunpack.c.l.b16 %v432
      %v506 = vunpack.c.h.b16 %v432
      %v507 = vunpack.c.l.b16 %v433
      %v508 = vunpack.c.h.b16 %v433
      %v509 = vunpack.c.l.b16 %v434
      %v510 = vunpack.c.h.b16 %v434
      %v511 = vunpack.c.l.b16 %v435
      %v512 = vunpack.c.h.b16 %v435
      %v513 = vunpack.c.l.b16 %v436
      %v514 = vunpack.c.h.b16 %v436
      %v515 = vunpack.c.l.b16 %v437
      %v516 = vunpack.c.h.b16 %v437
      %v517 = vunpack.c.l.b16 %v438
      %v518 = vunpack.c.h.b16 %v438
      %v519 = vunpack.c.l.b16 %v439
      %v520 = vunpack.c.h.b16 %v439
      %v521 = vunpack.c.l.b16 %v440
      %v522 = vunpack.c.h.b16 %v440
      %v523 = vunpack.c.l.b16 %v441
      %v524 = vunpack.c.h.b16 %v441
      %v525 = vunpack.c.l.b16 %v442
      %v526 = vunpack.c.h.b16 %v442
      %v527 = vunpack.c.l.b16 %v443
      %v528 = vunpack.c.h.b16 %v443
      %v529 = vunpack.c.l.b16 %v444
      %v530 = vunpack.c.h.b16 %v444
      %v531 = vunpack.c.l.b16 %v445
      %v532 = vunpack.c.h.b16 %v445
      %v533 = vunpack.c.l.b16 %v446
      %v534 = vunpack.c.h.b16 %v446
      %v535 = vunpack.c.l.b16 %v447
      %v536 = vunpack.c.h.b16 %v447
      %v537 = vunpack.c.l.b16 %v448
      %v538 = vunpack.c.h.b16 %v448
      %v539 = vunpack.c.l.b16 %v449
      %v540 = vunpack.c.h.b16 %v449
      %v541 = vunpack.c.l.b16 %v450
      %v542 = vunpack.c.h.b16 %v450
      %v543 = vunpack.c.l.b16 %v451
      %v544 = vunpack.c.h.b16 %v451
      %v545 = vunpack.c.l.b16 %v452
      %v546 = vunpack.c.h.b16 %v452
      %v547 = vunpack.c.l.b16 %v453
      %v548 = vunpack.c.h.b16 %v453
      %v549 = vunpack.c.l.b16 %v454
      %v550 = vunpack.c.h.b16 %v454
      %v551 = vpack.c.b16 %v489, %v487
      %v552 = vpack.c.b16 %v490, %v488
      %v553 = vpack.c.b16 %v493, %v491
      %v554 = vpack.c.b16 %v494, %v492
      %v555 = vpack.c.b16 %v497, %v495
      %v556 = vpack.c.b16 %v498, %v496
      %v557 = vpack.c.b16 %v501, %v499
      %v558 = vpack.c.b16 %v502, %v500
      %v559 = vpack.c.b16 %v505, %v503
      %v560 = vpack.c.b16 %v506, %v504
      %v561 = vpack.c.b16 %v509, %v507
      %v562 = vpack.c.b16 %v510, %v508
      %v563 = vpack.c.b16 %v513, %v511
      %v564 = vpack.c.b16 %v514, %v512
      %v565 = vpack.c.b16 %v517, %v515
      %v566 = vpack.c.b16 %v518, %v516
      %v567 = vpack.c.b16 %v521, %v519
      %v568 = vpack.c.b16 %v522, %v520
      %v569 = vpack.c.b16 %v525, %v523
      %v570 = vpack.c.b16 %v526, %v524
      %v571 = vpack.c.b16 %v529, %v527
      %v572 = vpack.c.b16 %v530, %v528
      %v573 = vpack.c.b16 %v533, %v531
      %v574 = vpack.c.b16 %v534, %v532
      %v575 = vpack.c.b16 %v537, %v535
      %v576 = vpack.c.b16 %v538, %v536
      %v577 = vpack.c.b16 %v541, %v539
      %v578 = vpack.c.b16 %v542, %v540
      %v579 = vpack.c.b16 %v545, %v543
      %v580 = vpack.c.b16 %v546, %v544
      %v581 = vpack.c.b16 %v549, %v547
      %v582 = vpack.c.b16 %v550, %v548
      %615 = vmatpush.bf16.msra.mxu0 %v382
      %616 = vmatpush.bf16.msra.mxu0 %v381
      %617 = vmatpush.bf16.msra.mxu0 %v380
      %618 = vmatpush.bf16.msra.mxu0 %v379
      %619 = vmatpush.bf16.msra.mxu0 %v378
      %620 = vmatpush.bf16.msra.mxu0 %v377
      %621 = vmatpush.bf16.msra.mxu0 %v376
      %622 = vmatpush.bf16.msra.mxu0 %v375
      %623 = vmatmul.bf16.gmra.mxu0 %v551
      %v624 = vpop.f32.mrf.mxu0
      %v625 = vadd.f32 0.0, %v624
      %v626 = vpop.f32.mrf.mxu0
      %v627 = vadd.f32 0.0, %v626
      %628 = vmatmul.bf16.gmra.mxu0 %v553
      %v629 = vpop.f32.mrf.mxu0
      %v630 = vadd.f32 0.0, %v629
      %v631 = vpop.f32.mrf.mxu0
      %v632 = vadd.f32 0.0, %v631
      %633 = vmatmul.bf16.gmra.mxu0 %v555
      %v634 = vpop.f32.mrf.mxu0
      %v635 = vadd.f32 0.0, %v634
      %v636 = vpop.f32.mrf.mxu0
      %v637 = vadd.f32 0.0, %v636
      %638 = vmatmul.bf16.gmra.mxu0 %v557
      %v639 = vpop.f32.mrf.mxu0
      %v640 = vadd.f32 0.0, %v639
      %v641 = vpop.f32.mrf.mxu0
      %v642 = vadd.f32 0.0, %v641
      %643 = vmatmul.bf16.gmra.mxu0 %v559
      %v644 = vpop.f32.mrf.mxu0
      %v645 = vadd.f32 0.0, %v644
      %v646 = vpop.f32.mrf.mxu0
      %v647 = vadd.f32 0.0, %v646
      %648 = vmatmul.bf16.gmra.mxu0 %v561
      %v649 = vpop.f32.mrf.mxu0
      %v650 = vadd.f32 0.0, %v649
      %v651 = vpop.f32.mrf.mxu0
      %v652 = vadd.f32 0.0, %v651
      %653 = vmatmul.bf16.gmra.mxu0 %v563
      %v654 = vpop.f32.mrf.mxu0
      %v655 = vadd.f32 0.0, %v654
      %v656 = vpop.f32.mrf.mxu0
      %v657 = vadd.f32 0.0, %v656
      %658 = vmatmul.bf16.gmra.mxu0 %v565
      %v659 = vpop.f32.mrf.mxu0
      %v660 = vadd.f32 0.0, %v659
      %v661 = vpop.f32.mrf.mxu0
      %v662 = vadd.f32 0.0, %v661
      %663 = vmatmul.bf16.gmra.mxu0 %v567
      %v664 = vpop.f32.mrf.mxu0
      %v665 = vadd.f32 0.0, %v664
      %v666 = vpop.f32.mrf.mxu0
      %v667 = vadd.f32 0.0, %v666
      %668 = vmatmul.bf16.gmra.mxu0 %v569
      %v669 = vpop.f32.mrf.mxu0
      %v670 = vadd.f32 0.0, %v669
      %v671 = vpop.f32.mrf.mxu0
      %v672 = vadd.f32 0.0, %v671
      %673 = vmatmul.bf16.gmra.mxu0 %v571
      %v674 = vpop.f32.mrf.mxu0
      %v675 = vadd.f32 0.0, %v674
      %v676 = vpop.f32.mrf.mxu0
      %v677 = vadd.f32 0.0, %v676
      %678 = vmatmul.bf16.gmra.mxu0 %v573
      %v679 = vpop.f32.mrf.mxu0
      %v680 = vadd.f32 0.0, %v679
      %v681 = vpop.f32.mrf.mxu0
      %v682 = vadd.f32 0.0, %v681
      %683 = vmatmul.bf16.gmra.mxu0 %v575
      %v684 = vpop.f32.mrf.mxu0
      %v685 = vadd.f32 0.0, %v684
      %v686 = vpop.f32.mrf.mxu0
      %v687 = vadd.f32 0.0, %v686
      %688 = vmatmul.bf16.gmra.mxu0 %v577
      %v689 = vpop.f32.mrf.mxu0
      %v690 = vadd.f32 0.0, %v689
      %v691 = vpop.f32.mrf.mxu0
      %v692 = vadd.f32 0.0, %v691
      %693 = vmatmul.bf16.gmra.mxu0 %v579
      %v694 = vpop.f32.mrf.mxu0
      %v695 = vadd.f32 0.0, %v694
      %v696 = vpop.f32.mrf.mxu0
      %v697 = vadd.f32 0.0, %v696
      %698 = vmatmul.bf16.gmra.mxu0 %v581
      %v699 = vpop.f32.mrf.mxu0
      %v700 = vadd.f32 0.0, %v699
      %v701 = vpop.f32.mrf.mxu0
      %v702 = vadd.f32 0.0, %v701
      %703 = vdwg.mxu0
      %704 = vmatpush.bf16.msra.mxu0 %v390
      %705 = vmatpush.bf16.msra.mxu0 %v389
      %706 = vmatpush.bf16.msra.mxu0 %v388
      %707 = vmatpush.bf16.msra.mxu0 %v387
      %708 = vmatpush.bf16.msra.mxu0 %v386
      %709 = vmatpush.bf16.msra.mxu0 %v385
      %710 = vmatpush.bf16.msra.mxu0 %v384
      %711 = vmatpush.bf16.msra.mxu0 %v383
      %712 = vmatmul.bf16.gmra.mxu0 %v552
      %v713 = vpop.f32.mrf.mxu0
      %v714 = vadd.f32 %v625, %v713
      %v715 = vpop.f32.mrf.mxu0
      %v716 = vadd.f32 %v627, %v715
      %717 = vmatmul.bf16.gmra.mxu0 %v554
      %v718 = vpop.f32.mrf.mxu0
      %v719 = vadd.f32 %v630, %v718
      %v720 = vpop.f32.mrf.mxu0
      %v721 = vadd.f32 %v632, %v720
      %722 = vmatmul.bf16.gmra.mxu0 %v556
      %v723 = vpop.f32.mrf.mxu0
      %v724 = vadd.f32 %v635, %v723
      %v725 = vpop.f32.mrf.mxu0
      %v726 = vadd.f32 %v637, %v725
      %727 = vmatmul.bf16.gmra.mxu0 %v558
      %v728 = vpop.f32.mrf.mxu0
      %v729 = vadd.f32 %v640, %v728
      %v730 = vpop.f32.mrf.mxu0
      %v731 = vadd.f32 %v642, %v730
      %732 = vmatmul.bf16.gmra.mxu0 %v560
      %v733 = vpop.f32.mrf.mxu0
      %v734 = vadd.f32 %v645, %v733
      %v735 = vpop.f32.mrf.mxu0
      %v736 = vadd.f32 %v647, %v735
      %737 = vmatmul.bf16.gmra.mxu0 %v562
      %v738 = vpop.f32.mrf.mxu0
      %v739 = vadd.f32 %v650, %v738
      %v740 = vpop.f32.mrf.mxu0
      %v741 = vadd.f32 %v652, %v740
      %742 = vmatmul.bf16.gmra.mxu0 %v564
      %v743 = vpop.f32.mrf.mxu0
      %v744 = vadd.f32 %v655, %v743
      %v745 = vpop.f32.mrf.mxu0
      %v746 = vadd.f32 %v657, %v745
      %747 = vmatmul.bf16.gmra.mxu0 %v566
      %v748 = vpop.f32.mrf.mxu0
      %v749 = vadd.f32 %v660, %v748
      %v750 = vpop.f32.mrf.mxu0
      %v751 = vadd.f32 %v662, %v750
      %752 = vmatmul.bf16.gmra.mxu0 %v568
      %v753 = vpop.f32.mrf.mxu0
      %v754 = vadd.f32 %v665, %v753
      %v755 = vpop.f32.mrf.mxu0
      %v756 = vadd.f32 %v667, %v755
      %757 = vmatmul.bf16.gmra.mxu0 %v570
      %v758 = vpop.f32.mrf.mxu0
      %v759 = vadd.f32 %v670, %v758
      %v760 = vpop.f32.mrf.mxu0
      %v761 = vadd.f32 %v672, %v760
      %762 = vmatmul.bf16.gmra.mxu0 %v572
      %v763 = vpop.f32.mrf.mxu0
      %v764 = vadd.f32 %v675, %v763
      %v765 = vpop.f32.mrf.mxu0
      %v766 = vadd.f32 %v677, %v765
      %767 = vmatmul.bf16.gmra.mxu0 %v574
      %v768 = vpop.f32.mrf.mxu0
      %v769 = vadd.f32 %v680, %v768
      %v770 = vpop.f32.mrf.mxu0
      %v771 = vadd.f32 %v682, %v770
      %772 = vmatmul.bf16.gmra.mxu0 %v576
      %v773 = vpop.f32.mrf.mxu0
      %v774 = vadd.f32 %v685, %v773
      %v775 = vpop.f32.mrf.mxu0
      %v776 = vadd.f32 %v687, %v775
      %777 = vmatmul.bf16.gmra.mxu0 %v578
      %v778 = vpop.f32.mrf.mxu0
      %v779 = vadd.f32 %v690, %v778
      %v780 = vpop.f32.mrf.mxu0
      %v781 = vadd.f32 %v692, %v780
      %782 = vmatmul.bf16.gmra.mxu0 %v580
      %v783 = vpop.f32.mrf.mxu0
      %v784 = vadd.f32 %v695, %v783
      %v785 = vpop.f32.mrf.mxu0
      %v786 = vadd.f32 %v697, %v785
      %787 = vmatmul.bf16.gmra.mxu0 %v582
      %v788 = vpop.f32.mrf.mxu0
      %v789 = vadd.f32 %v700, %v788
      %v790 = vpop.f32.mrf.mxu0
      %v791 = vadd.f32 %v702, %v790
      %792 = vdwg.mxu0
      %v793 = vadd.f32 %v391, %v714
      %v794 = vadd.f32 %v392, %v716
      %v795 = vadd.f32 %v393, %v719
      %v796 = vadd.f32 %v394, %v721
      %v797 = vadd.f32 %v395, %v724
      %v798 = vadd.f32 %v396, %v726
      %v799 = vadd.f32 %v397, %v729
      %v800 = vadd.f32 %v398, %v731
      %v801 = vadd.f32 %v399, %v734
      %v802 = vadd.f32 %v400, %v736
      %v803 = vadd.f32 %v401, %v739
      %v804 = vadd.f32 %v402, %v741
      %v805 = vadd.f32 %v403, %v744
      %v806 = vadd.f32 %v404, %v746
      %v807 = vadd.f32 %v405, %v749
      %v808 = vadd.f32 %v406, %v751
      %v809 = vadd.f32 %v407, %v754
      %v810 = vadd.f32 %v408, %v756
      %v811 = vadd.f32 %v409, %v759
      %v812 = vadd.f32 %v410, %v761
      %v813 = vadd.f32 %v411, %v764
      %v814 = vadd.f32 %v412, %v766
      %v815 = vadd.f32 %v413, %v769
      %v816 = vadd.f32 %v414, %v771
      %v817 = vadd.f32 %v415, %v774
      %v818 = vadd.f32 %v416, %v776
      %v819 = vadd.f32 %v417, %v779
      %v820 = vadd.f32 %v418, %v781
      %v821 = vadd.f32 %v419, %v784
      %v822 = vadd.f32 %v420, %v786
      %v823 = vadd.f32 %v421, %v789
      %v824 = vadd.f32 %v422, %v791
      %825 = vst [vmem:[#allocation2] sm:$0xff] %v793
      %826 = vst [vmem:[#allocation2 + $0x8] sm:$0xff] %v794
      %827 = vst [vmem:[#allocation2 + $0x10] sm:$0xff] %v795
      %828 = vst [vmem:[#allocation2 + $0x18] sm:$0xff] %v796
      %829 = vst [vmem:[#allocation2 + $0x20] sm:$0xff] %v797
      %830 = vst [vmem:[#allocation2 + $0x28] sm:$0xff] %v798
      %831 = vst [vmem:[#allocation2 + $0x30] sm:$0xff] %v799
      %832 = vst [vmem:[#allocation2 + $0x38] sm:$0xff] %v800
      %833 = vst [vmem:[#allocation2 + $0x40] sm:$0xff] %v801
      %834 = vst [vmem:[#allocation2 + $0x48] sm:$0xff] %v802
      %835 = vst [vmem:[#allocation2 + $0x50] sm:$0xff] %v803
      %836 = vst [vmem:[#allocation2 + $0x58] sm:$0xff] %v804
      %837 = vst [vmem:[#allocation2 + $0x60] sm:$0xff] %v805
      %838 = vst [vmem:[#allocation2 + $0x68] sm:$0xff] %v806
      %839 = vst [vmem:[#allocation2 + $0x70] sm:$0xff] %v807
      %840 = vst [vmem:[#allocation2 + $0x78] sm:$0xff] %v808
      %841 = vst [vmem:[#allocation2 + $0x80] sm:$0xff] %v809
      %842 = vst [vmem:[#allocation2 + $0x88] sm:$0xff] %v810
      %843 = vst [vmem:[#allocation2 + $0x90] sm:$0xff] %v811
      %844 = vst [vmem:[#allocation2 + $0x98] sm:$0xff] %v812
      %845 = vst [vmem:[#allocation2 + $0xa0] sm:$0xff] %v813
      %846 = vst [vmem:[#allocation2 + $0xa8] sm:$0xff] %v814
      %847 = vst [vmem:[#allocation2 + $0xb0] sm:$0xff] %v815
      %848 = vst [vmem:[#allocation2 + $0xb8] sm:$0xff] %v816
      %849 = vst [vmem:[#allocation2 + $0xc0] sm:$0xff] %v817
      %850 = vst [vmem:[#allocation2 + $0xc8] sm:$0xff] %v818
      %851 = vst [vmem:[#allocation2 + $0xd0] sm:$0xff] %v819
      %852 = vst [vmem:[#allocation2 + $0xd8] sm:$0xff] %v820
      %853 = vst [vmem:[#allocation2 + $0xe0] sm:$0xff] %v821
      %854 = vst [vmem:[#allocation2 + $0xe8] sm:$0xff] %v822
      %855 = vst [vmem:[#allocation2 + $0xf0] sm:$0xff] %v823
      %856 = vst [vmem:[#allocation2 + $0xf8] sm:$0xff] %v824
      // Predicated region
      $region37: #{matmul_q.1} parent=31 // pred_check
        %p857 = pneg %p267
      $region38: #{matmul_q.1} parent=31 // pred_check_branch
        %859 = sbr.rel (%p857) target = $region40
      $region39: #{matmul_q.1} parent=31 // pred_region
        %v860 = vld [vmem:[#allocation2] sm:$0xff]
        %v861 = vld [vmem:[#allocation2 + $0x8] sm:$0xff]
        %v862 = vld [vmem:[#allocation2 + $0x10] sm:$0xff]
        %v863 = vld [vmem:[#allocation2 + $0x18] sm:$0xff]
        %v864 = vld [vmem:[#allocation2 + $0x20] sm:$0xff]
        %v865 = vld [vmem:[#allocation2 + $0x28] sm:$0xff]
        %v866 = vld [vmem:[#allocation2 + $0x30] sm:$0xff]
        %v867 = vld [vmem:[#allocation2 + $0x38] sm:$0xff]
        %v868 = vld [vmem:[#allocation2 + $0x40] sm:$0xff]
        %v869 = vld [vmem:[#allocation2 + $0x48] sm:$0xff]
        %v870 = vld [vmem:[#allocation2 + $0x50] sm:$0xff]
        %v871 = vld [vmem:[#allocation2 + $0x58] sm:$0xff]
        %v872 = vld [vmem:[#allocation2 + $0x60] sm:$0xff]
        %v873 = vld [vmem:[#allocation2 + $0x68] sm:$0xff]
        %v874 = vld [vmem:[#allocation2 + $0x70] sm:$0xff]
        %v875 = vld [vmem:[#allocation2 + $0x78] sm:$0xff]
        %v876 = vld [vmem:[#allocation2 + $0x80] sm:$0xff]
        %v877 = vld [vmem:[#allocation2 + $0x88] sm:$0xff]
        %v878 = vld [vmem:[#allocation2 + $0x90] sm:$0xff]
        %v879 = vld [vmem:[#allocation2 + $0x98] sm:$0xff]
        %v880 = vld [vmem:[#allocation2 + $0xa0] sm:$0xff]
        %v881 = vld [vmem:[#allocation2 + $0xa8] sm:$0xff]
        %v882 = vld [vmem:[#allocation2 + $0xb0] sm:$0xff]
        %v883 = vld [vmem:[#allocation2 + $0xb8] sm:$0xff]
        %v884 = vld [vmem:[#allocation2 + $0xc0] sm:$0xff]
        %v885 = vld [vmem:[#allocation2 + $0xc8] sm:$0xff]
        %v886 = vld [vmem:[#allocation2 + $0xd0] sm:$0xff]
        %v887 = vld [vmem:[#allocation2 + $0xd8] sm:$0xff]
        %v888 = vld [vmem:[#allocation2 + $0xe0] sm:$0xff]
        %v889 = vld [vmem:[#allocation2 + $0xe8] sm:$0xff]
        %v890 = vld [vmem:[#allocation2 + $0xf0] sm:$0xff]
        %v891 = vld [vmem:[#allocation2 + $0xf8] sm:$0xff]
        %v892 = vld [vmem:[%s257] sm:$0x1]
        %v894 = vperm.slane %v892, 0
        %v896 = vmul.f32 %v860, %v894
        %v897 = vmul.f32 %v861, %v894
        %v898 = vmul.f32 %v862, %v894
        %v899 = vmul.f32 %v863, %v894
        %v900 = vmul.f32 %v864, %v894
        %v901 = vmul.f32 %v865, %v894
        %v902 = vmul.f32 %v866, %v894
        %v903 = vmul.f32 %v867, %v894
        %v904 = vmul.f32 %v868, %v894
        %v905 = vmul.f32 %v869, %v894
        %v906 = vmul.f32 %v870, %v894
        %v907 = vmul.f32 %v871, %v894
        %v908 = vmul.f32 %v872, %v894
        %v909 = vmul.f32 %v873, %v894
        %v910 = vmul.f32 %v874, %v894
        %v911 = vmul.f32 %v875, %v894
        %v912 = vmul.f32 %v876, %v894
        %v913 = vmul.f32 %v877, %v894
        %v914 = vmul.f32 %v878, %v894
        %v915 = vmul.f32 %v879, %v894
        %v916 = vmul.f32 %v880, %v894
        %v917 = vmul.f32 %v881, %v894
        %v918 = vmul.f32 %v882, %v894
        %v919 = vmul.f32 %v883, %v894
        %v920 = vmul.f32 %v884, %v894
        %v921 = vmul.f32 %v885, %v894
        %v922 = vmul.f32 %v886, %v894
        %v923 = vmul.f32 %v887, %v894
        %v924 = vmul.f32 %v888, %v894
        %v925 = vmul.f32 %v889, %v894
        %v926 = vmul.f32 %v890, %v894
        %v927 = vmul.f32 %v891, %v894
        %v928 = vpack.c.bf16 %v896, %v896
        %v929 = vpack.c.bf16 %v897, %v897
        %v930 = vpack.c.bf16 %v898, %v898
        %v931 = vpack.c.bf16 %v899, %v899
        %v932 = vpack.c.bf16 %v900, %v900
        %v933 = vpack.c.bf16 %v901, %v901
        %v934 = vpack.c.bf16 %v902, %v902
        %v935 = vpack.c.bf16 %v903, %v903
        %v936 = vpack.c.bf16 %v904, %v904
        %v937 = vpack.c.bf16 %v905, %v905
        %v938 = vpack.c.bf16 %v906, %v906
        %v939 = vpack.c.bf16 %v907, %v907
        %v940 = vpack.c.bf16 %v908, %v908
        %v941 = vpack.c.bf16 %v909, %v909
        %v942 = vpack.c.bf16 %v910, %v910
        %v943 = vpack.c.bf16 %v911, %v911
        %v944 = vpack.c.bf16 %v912, %v912
        %v945 = vpack.c.bf16 %v913, %v913
        %v946 = vpack.c.bf16 %v914, %v914
        %v947 = vpack.c.bf16 %v915, %v915
        %v948 = vpack.c.bf16 %v916, %v916
        %v949 = vpack.c.bf16 %v917, %v917
        %v950 = vpack.c.bf16 %v918, %v918
        %v951 = vpack.c.bf16 %v919, %v919
        %v952 = vpack.c.bf16 %v920, %v920
        %v953 = vpack.c.bf16 %v921, %v921
        %v954 = vpack.c.bf16 %v922, %v922
        %v955 = vpack.c.bf16 %v923, %v923
        %v956 = vpack.c.bf16 %v924, %v924
        %v957 = vpack.c.bf16 %v925, %v925
        %v958 = vpack.c.bf16 %v926, %v926
        %v959 = vpack.c.bf16 %v927, %v927
        %960 = vst [vmem:[%s265] sm:$0xf] %v928
        %961 = vst [vmem:[%s265 + $0x4] sm:$0xf] %v929
        %962 = vst [vmem:[%s265 + $0x8] sm:$0xf] %v930
        %963 = vst [vmem:[%s265 + $0xc] sm:$0xf] %v931
        %964 = vst [vmem:[%s265 + $0x10] sm:$0xf] %v932
        %965 = vst [vmem:[%s265 + $0x14] sm:$0xf] %v933
        %966 = vst [vmem:[%s265 + $0x18] sm:$0xf] %v934
        %967 = vst [vmem:[%s265 + $0x1c] sm:$0xf] %v935
        %968 = vst [vmem:[%s265 + $0x20] sm:$0xf] %v936
        %969 = vst [vmem:[%s265 + $0x24] sm:$0xf] %v937
        %970 = vst [vmem:[%s265 + $0x28] sm:$0xf] %v938
        %971 = vst [vmem:[%s265 + $0x2c] sm:$0xf] %v939
        %972 = vst [vmem:[%s265 + $0x30] sm:$0xf] %v940
        %973 = vst [vmem:[%s265 + $0x34] sm:$0xf] %v941
        %974 = vst [vmem:[%s265 + $0x38] sm:$0xf] %v942
        %975 = vst [vmem:[%s265 + $0x3c] sm:$0xf] %v943
        %976 = vst [vmem:[%s265 + $0x40] sm:$0xf] %v944
        %977 = vst [vmem:[%s265 + $0x44] sm:$0xf] %v945
        %978 = vst [vmem:[%s265 + $0x48] sm:$0xf] %v946
        %979 = vst [vmem:[%s265 + $0x4c] sm:$0xf] %v947
        %980 = vst [vmem:[%s265 + $0x50] sm:$0xf] %v948
        %981 = vst [vmem:[%s265 + $0x54] sm:$0xf] %v949
        %982 = vst [vmem:[%s265 + $0x58] sm:$0xf] %v950
        %983 = vst [vmem:[%s265 + $0x5c] sm:$0xf] %v951
        %984 = vst [vmem:[%s265 + $0x60] sm:$0xf] %v952
        %985 = vst [vmem:[%s265 + $0x64] sm:$0xf] %v953
        %986 = vst [vmem:[%s265 + $0x68] sm:$0xf] %v954
        %987 = vst [vmem:[%s265 + $0x6c] sm:$0xf] %v955
        %988 = vst [vmem:[%s265 + $0x70] sm:$0xf] %v956
        %989 = vst [vmem:[%s265 + $0x74] sm:$0xf] %v957
        %990 = vst [vmem:[%s265 + $0x78] sm:$0xf] %v958
        %991 = vst [vmem:[%s265 + $0x7c] sm:$0xf] %v959
      $region40: #{matmul_q.1} parent=31 // pred_fallthru
        _
      %s992 = smul.u32 32, %s19
      %p993 = scmp.lt.s32.totalorder %s992, 63
      %s994 = scalar_select %p993, %s992, 63
      %p995 = scmp.lt.s32.totalorder %s20, 0
      %s996 = scalar_select %p995, %s20, 0
      %s997 = sadd.s32 %s996, %s994
      %s998 = smul.addr %s997, 4
      %s999 = scalar_lea.vmem %s3, %s998
      // Predicated region
      $region41: #{matmul_q.1} parent=31 // pred_check
        %p1000 = pneg %p135
      $region42: #{matmul_q.1} parent=31 // pred_check_branch
        %1002 = sbr.rel (%p1000) target = $region44
      $region43: #{matmul_q.1} parent=31 // pred_region
        %s1003 = smul.u32 32, %s19
      $region44: #{matmul_q.1} parent=31 // pred_fallthru
        _
    $region32: #{matmul_q.1} parent=5 // pred_fallthru
      _
    %p1004 = scmp.le.s32.totalorder 2, %s9
    // Predicated region
    $region45: #{matmul_q.1} parent=5 // pred_check
      %p1005 = pneg %p1004
    $region46: #{matmul_q.1} parent=5 // pred_check_branch
      %1007 = sbr.rel (%p1005) target = $region48
    $region47: #{matmul_q.1} parent=5 // pred_region
      %s1008 = ssub.s32 %s9, 2
      // Predicated region
      $region49: #{matmul_q.1} parent=47 // pred_check
        %p1009 = pneg %p141
      $region50: #{matmul_q.1} parent=47 // pred_check_branch
        %1011 = sbr.rel (%p1009) target = $region52
      $region51: #{matmul_q.1} parent=47 // pred_region
        %s1012 = smul.u32 32, %s22
        %p1013 = scmp.lt.s32.totalorder %s1012, 63
        %s1014 = scalar_select %p1013, %s1012, 63
        %p1015 = scmp.lt.s32.totalorder %s23, 0
        %s1016 = scalar_select %p1015, %s23, 0
        %s1017 = sadd.s32 %s1016, %s1014
        %s1018 = smul.addr %s1017, 4
        %s1019 = scalar_lea.vmem %s3, %s1018
      $region52: #{matmul_q.1} parent=47 // pred_fallthru
        _
    $region48: #{matmul_q.1} parent=5 // pred_fallthru
      _
  $region6: #{matmul_q.1} parent=0 // loop_footer
    %s13 = sadd.s32 1, %s9
  $region7: #{matmul_q.1} parent=0 // loop_footer_branch
    %8 = sbr.rel target = $region3
  $region8: #{matmul_q.1} parent=0 // loop_exit
    _

</llo_original>
